<compile_context>
chip_gen: v6e
topology: v6e:2x2x1
jax: 0.10.0
libtpu: 0.0.40
codegen_flags: <defaults>
</compile_context>

<pallas_src>
import jax
import jax.numpy as jnp
from jax.experimental import pallas as pl
from jax.experimental.pallas import tpu as pltpu

M_LATENT = 32                 # latent dim M
HIDDEN = 256                  # decoder hidden width
OUT_FLAT = 28 * 28            # 784 — stored directly from the kernel (no wrapper depad)
OUT_PAD = 7 * 128             # 896 — internal lane-dense width for w2/b2 MXU tiles
MAX_TILE_B = 1024             # per perf review 1024–2048; 1024 keeps VMEM safe on v7x
OUT_DTYPE = jnp.bfloat16      # halves the dominant output writeback stream


def _round_up(x, m):
    return ((x + m - 1) // m) * m


def _decoder_kernel(z_ref, w1_ref, b1_ref, w2_ref, b2_ref, out_ref):
    # z:  (TB, M)       bf16   w1: (M, H)        bf16   b1: (1, H)       f32
    # w2: (H, OUT_PAD)  bf16   b2: (1, OUT_PAD)  f32    out:(TB, OUT_FLAT) bf16
    h = jnp.dot(z_ref[...], w1_ref[...], preferred_element_type=jnp.float32)
    h = jnp.maximum(h + b1_ref[...], 0.0)                      # bias + ReLU on VPU
    logits = jnp.dot(h.astype(jnp.bfloat16), w2_ref[...],
                     preferred_element_type=jnp.float32)       # (TB, OUT_PAD) f32
    # Store only the 784 real lanes; the last 16-lane vreg is a masked vst.
    out_ref[...] = (logits + b2_ref[...])[:, :OUT_FLAT].astype(out_ref.dtype)


def prepare_params(params):
    """One-time weight packing: pad w2/b2 to 896 lanes, cast matmul weights to bf16.

    Call once at init / checkpoint-load time, NOT per forward call, so the
    pad/cast HBM traffic does not ride along with every decode.
    """
    return {
        "w1": params["w1"].astype(jnp.bfloat16),
        "b1": params["b1"].astype(jnp.float32),
        "w2": jnp.pad(params["w2"],
                      ((0, 0), (0, OUT_PAD - OUT_FLAT))).astype(jnp.bfloat16),
        "b2": jnp.pad(params["b2"],
                      ((0, 0), (0, OUT_PAD - OUT_FLAT))).astype(jnp.float32),
    }


def bernoulli_decoder_forward(z, packed):
    """Pallas implementation of BernoulliDecoder.forward.

    Returns the logits that parameterize
    td.Independent(td.ContinuousBernoulli(logits=logits), 3),
    shaped (B, 1, 28, 28) in NCHW like the PyTorch module.
    """
    B = z.shape[0]
    if B >= MAX_TILE_B:
        tile_b = MAX_TILE_B                  # big batches: MXU/roofline-sized tiles
    else:
        tile_b = _round_up(B, 8)             # small batches: sublane-align only
    b_pad = _round_up(B, tile_b)
    num_tiles = b_pad // tile_b

    z_p = jnp.pad(z.astype(jnp.bfloat16), ((0, b_pad - B), (0, 0)))

    w1, b1, w2, b2 = packed["w1"], packed["b1"], packed["w2"], packed["b2"]

    flops = 2 * b_pad * (M_LATENT * HIDDEN + HIDDEN * OUT_PAD)
    bytes_accessed = (z_p.size * 2 + w1.size * 2 + b1.size * 4
                      + w2.size * 2 + b2.size * 4
                      + b_pad * OUT_FLAT * jnp.dtype(OUT_DTYPE).itemsize)

    logits_flat = pl.pallas_call(
        _decoder_kernel,
        out_shape=jax.ShapeDtypeStruct((b_pad, OUT_FLAT), OUT_DTYPE),
        grid_spec=pl.GridSpec(
            grid=(num_tiles,),
            in_specs=[
                # activations stream per batch tile (double-buffered)
                pl.BlockSpec((tile_b, M_LATENT), lambda i: (i, 0)),
                # weights/biases: constant index_map -> fetched once, VMEM-resident
                pl.BlockSpec((M_LATENT, HIDDEN), lambda i: (0, 0)),
                pl.BlockSpec((1, HIDDEN), lambda i: (0, 0)),
                pl.BlockSpec((HIDDEN, OUT_PAD), lambda i: (0, 0)),
                pl.BlockSpec((1, OUT_PAD), lambda i: (0, 0)),
            ],
            # 784 equals the full array last dim -> legal BlockSpec; no depad pass.
            out_specs=pl.BlockSpec((tile_b, OUT_FLAT), lambda i: (i, 0)),
        ),
        compiler_params=pltpu.CompilerParams(
            # batch tiles are independent; on v7x use pltpu.CORE_PARALLEL to
            # shard across both TensorCores (string "parallel" kept for
            # portability across v5e/v6e).
            dimension_semantics=("parallel",),
            # ~12 MiB live at tile_b=1024 (bf16 out buffers + f32 intermediates);
            # 48 MiB cap stays under v7x's 64 MiB physical VMEM.
            vmem_limit_bytes=48 * 1024 * 1024,
        ),
        cost_estimate=pl.CostEstimate(
            flops=flops, transcendentals=0, bytes_accessed=bytes_accessed),
    )(z_p, w1, b1, w2, b2)

    # Drop batch padding (no-op when B == b_pad); NCHW to match the PyTorch
    # decoder output (Independent(..., 3) event dims).
    logits = logits_flat[:B].reshape(B, 1, 28, 28)
    # TODO(synk): td.Independent(td.ContinuousBernoulli(logits=...), 3) is a
    # distribution object, not a tensor; we return its parameterization.
    return logits


def init_params(key):
    k1, k2, k3, k4 = jax.random.split(key, 4)
    params = {
        "w1": jax.random.normal(k1, (M_LATENT, HIDDEN), jnp.float32) * 0.05,
        "b1": jax.random.normal(k2, (1, HIDDEN), jnp.float32) * 0.01,
        "w2": jax.random.normal(k3, (HIDDEN, OUT_FLAT), jnp.float32) * 0.05,
        "b2": jax.random.normal(k4, (1, OUT_FLAT), jnp.float32) * 0.01,
        # nn.Parameter(torch.ones(28, 28) * 0.5) — present in the module but
        # unused by forward(); kept for parameter parity.
        "std": jnp.full((28, 28), 0.5, jnp.float32),
    }
    return params


def _reference_decoder(z, params):
    # Pure-JAX reference with the same bf16 rounding (inputs and final output)
    # as the kernel; returned in f32 for comparison.
    zb = z.astype(jnp.bfloat16)
    w1b = params["w1"].astype(jnp.bfloat16)
    w2b = params["w2"].astype(jnp.bfloat16)
    h = jnp.dot(zb, w1b, preferred_element_type=jnp.float32)
    h = jnp.maximum(h + params["b1"], 0.0)
    logits = jnp.dot(h.astype(jnp.bfloat16), w2b,
                     preferred_element_type=jnp.float32) + params["b2"]
    logits = logits.astype(OUT_DTYPE).astype(jnp.float32)
    return logits.reshape(-1, 1, 28, 28)


if __name__ == "__main__":
    key = jax.random.PRNGKey(0)
    kp, kz = jax.random.split(key)
    params = init_params(kp)
    packed = prepare_params(params)          # one-time weight packing

    B = 8
    z = jax.random.normal(kz, (B, M_LATENT), jnp.float32)

    logits = bernoulli_decoder_forward(z, packed)
    jax.block_until_ready(logits)

    ref = _reference_decoder(z, params)
    assert logits.shape == (B, 1, 28, 28)
    diff = jnp.max(jnp.abs(logits.astype(jnp.float32) - ref))
    assert jnp.allclose(logits.astype(jnp.float32), ref, atol=5e-3, rtol=5e-3), float(diff)

    print("KERNEL_OK")
</pallas_src>

<mosaic_0001>
module attributes {stable_mosaic.version = 11 : i64} {
  func.func @_decoder_kernel(%arg0: i32, %arg1: memref<8x32xbf16, #tpu.memory_space<vmem>>, %arg2: memref<32x256xbf16, #tpu.memory_space<vmem>>, %arg3: memref<1x256xf32, #tpu.memory_space<vmem>>, %arg4: memref<256x896xbf16, #tpu.memory_space<vmem>>, %arg5: memref<1x896xf32, #tpu.memory_space<vmem>>, %arg6: memref<8x784xbf16, #tpu.memory_space<vmem>>) attributes {dimension_semantics = [#tpu.dimension_semantics<parallel>], iteration_bounds = array<i64: 1>, scalar_prefetch = 0 : i64, scratch_operands = 0 : i64, tpu.core_type = #tpu.core_type<tc>, window_params = [{transform_indices = @transform_0, window_bounds = array<i64: 8, 32>}, {pipeline_mode = #tpu.pipeline_mode<synchronous>, transform_indices = @transform_1, window_bounds = array<i64: 32, 256>}, {pipeline_mode = #tpu.pipeline_mode<synchronous>, transform_indices = @transform_2, window_bounds = array<i64: 1, 256>}, {pipeline_mode = #tpu.pipeline_mode<synchronous>, transform_indices = @transform_3, window_bounds = array<i64: 256, 896>}, {pipeline_mode = #tpu.pipeline_mode<synchronous>, transform_indices = @transform_4, window_bounds = array<i64: 1, 896>}, {transform_indices = @transform_5, window_bounds = array<i64: 8, 784>}]} {
    %c0 = arith.constant 0 : index
    %c0_0 = arith.constant 0 : index
    %0 = vector.load %arg1[%c0, %c0_0] : memref<8x32xbf16, #tpu.memory_space<vmem>>, vector<8x32xbf16>
    %c0_1 = arith.constant 0 : index
    %c0_2 = arith.constant 0 : index
    %1 = vector.load %arg2[%c0_1, %c0_2] : memref<32x256xbf16, #tpu.memory_space<vmem>>, vector<32x256xbf16>
    %cst = arith.constant dense<0.000000e+00> : vector<8x256xf32>
    %2 = tpu.matmul %0, %1, %cst {dimension_numbers = #tpu.dot_dimension_numbers<[1], [0], [0], [1], [0, 0, 1, 1], [], []>} : vector<8x32xbf16>, vector<32x256xbf16>, vector<8x256xf32> -> vector<8x256xf32>
    %c0_3 = arith.constant 0 : index
    %c0_4 = arith.constant 0 : index
    %3 = vector.load %arg3[%c0_3, %c0_4] : memref<1x256xf32, #tpu.memory_space<vmem>>, vector<1x256xf32>
    %4 = vector.broadcast %3 : vector<1x256xf32> to vector<8x256xf32>
    %5 = arith.addf %2, %4 : vector<8x256xf32>
    %cst_5 = arith.constant 0.000000e+00 : f32
    %6 = vector.broadcast %cst_5 : f32 to vector<8x256xf32>
    %7 = arith.maximumf %5, %6 : vector<8x256xf32>
    %8 = arith.truncf %7 : vector<8x256xf32> to vector<8x256xbf16>
    %c0_6 = arith.constant 0 : index
    %c0_7 = arith.constant 0 : index
    %9 = vector.load %arg4[%c0_6, %c0_7] : memref<256x896xbf16, #tpu.memory_space<vmem>>, vector<256x896xbf16>
    %cst_8 = arith.constant dense<0.000000e+00> : vector<8x896xf32>
    %10 = tpu.matmul %8, %9, %cst_8 {dimension_numbers = #tpu.dot_dimension_numbers<[1], [0], [0], [1], [0, 0, 1, 1], [], []>} : vector<8x256xbf16>, vector<256x896xbf16>, vector<8x896xf32> -> vector<8x896xf32>
    %c0_9 = arith.constant 0 : index
    %c0_10 = arith.constant 0 : index
    %11 = vector.load %arg5[%c0_9, %c0_10] : memref<1x896xf32, #tpu.memory_space<vmem>>, vector<1x896xf32>
    %12 = vector.broadcast %11 : vector<1x896xf32> to vector<8x896xf32>
    %13 = arith.addf %10, %12 : vector<8x896xf32>
    %14 = vector.extract_strided_slice %13 {offsets = [0, 0], sizes = [8, 784], strides = [1, 1]} : vector<8x896xf32> to vector<8x784xf32>
    %15 = arith.truncf %14 : vector<8x784xf32> to vector<8x784xbf16>
    %c0_11 = arith.constant 0 : index
    %c0_12 = arith.constant 0 : index
    %16 = vector.load %arg6[%c0_11, %c0_12] : memref<8x784xbf16, #tpu.memory_space<vmem>>, vector<8x784xbf16>
    tpu.vector_store %arg6[%c0_11, %c0_12], %15 {strides = array<i32>} : memref<8x784xbf16, #tpu.memory_space<vmem>>, vector<8x784xbf16>,
    return
  }
  func.func @transform_0(%arg0: i32) -> (i32, i32) {
    %c0_i32 = arith.constant 0 : i32
    %c0_i32_0 = arith.constant 0 : i32
    return %arg0, %c0_i32 : i32, i32
  }
  func.func @transform_1(%arg0: i32) -> (i32, i32) {
    %c0_i32 = arith.constant 0 : i32
    %c0_i32_0 = arith.constant 0 : i32
    %c0_i32_1 = arith.constant 0 : i32
    return %c0_i32, %c0_i32_0 : i32, i32
  }
  func.func @transform_2(%arg0: i32) -> (i32, i32) {
    %c0_i32 = arith.constant 0 : i32
    %c0_i32_0 = arith.constant 0 : i32
    %c0_i32_1 = arith.constant 0 : i32
    return %c0_i32, %c0_i32_0 : i32, i32
  }
  func.func @transform_3(%arg0: i32) -> (i32, i32) {
    %c0_i32 = arith.constant 0 : i32
    %c0_i32_0 = arith.constant 0 : i32
    %c0_i32_1 = arith.constant 0 : i32
    return %c0_i32, %c0_i32_0 : i32, i32
  }
  func.func @transform_4(%arg0: i32) -> (i32, i32) {
    %c0_i32 = arith.constant 0 : i32
    %c0_i32_0 = arith.constant 0 : i32
    %c0_i32_1 = arith.constant 0 : i32
    return %c0_i32, %c0_i32_0 : i32, i32
  }
  func.func @transform_5(%arg0: i32) -> (i32, i32) {
    %c0_i32 = arith.constant 0 : i32
    %c0_i32_0 = arith.constant 0 : i32
    return %arg0, %c0_i32 : i32, i32
  }
}

</mosaic_0001>

<llo_original>
// kernel: tpu_custom_call.1
$region0: #{tpu_custom_call.1}
  #allocation0 [shape = 'u32[]', space=smem, size = 0x4, offset = 0x4, fixed_abs, tag = 'smem constant byte address 0x4 - core index']
  #allocation1 [shape = 'u32[144,128]{1,0:T(1,128)}', space=vmem, size = 0x12000, scoped, tag = 'internal scratch']
  %s0 = inlined_call_operand.hbm [shape: bf16[8,32], index: 0, kind: input, shape index: {}]
  %s1 = inlined_call_operand.hbm [shape: bf16[32,256], index: 1, kind: input, shape index: {}]
  %s2 = inlined_call_operand.hbm [shape: f32[1,256], index: 2, kind: input, shape index: {}]
  %s3 = inlined_call_operand.hbm [shape: bf16[256,896], index: 3, kind: input, shape index: {}]
  %s4 = inlined_call_operand.vmem [shape: f32[1,896], index: 4, kind: input, shape index: {}]
  %s5 = inlined_call_operand.hbm [shape: bf16[8,784], index: 5, kind: output, shape index: {}]
  %s6 = sld [smem:[#allocation0]]
  $region46: #{tpu_custom_call.1} parent=0
    _
  %s8 = ssub.s32 1, %s6
  %s9 = scalar_select 0, %s8, %s6
  $region1: #{tpu_custom_call.1} parent=0
    #allocation2 [shape = 'u8[2048]{0}', space=vmem, size = 0x800, scoped, tag = 'input window, operand 0, single buffered']
    #allocation3 [shape = 's32[1]{0}', space=sflag, size = 0x4, scoped, tag = 'scoped memory for tpu_custom_call.1']
    #allocation4 [shape = 's32[1]{0}', space=sflag, size = 0x4, scoped, tag = 'scoped memory for tpu_custom_call.1']
    #allocation5 [shape = 'u8[16384]{0}', space=vmem, size = 0x4000, scoped, tag = 'input window, operand 1, single buffered']
    #allocation6 [shape = 's32[1]{0}', space=sflag, size = 0x4, scoped, tag = 'scoped memory for tpu_custom_call.1']
    #allocation7 [shape = 'u8[1024]{0}', space=vmem, size = 0x400, scoped, tag = 'input window, operand 2, single buffered']
    #allocation8 [shape = 'u8[458752]{0}', space=vmem, size = 0x70000, scoped, tag = 'input window, operand 3, single buffered']
    #allocation9 [shape = 's32[1]{0}', space=sflag, size = 0x4, scoped, tag = 'scoped memory for tpu_custom_call.1']
    #allocation10 [shape = 'u8[14336]{0}', space=vmem, size = 0x3800, scoped, tag = 'output window, operand 0, single buffered']
    %10 = vsyncpa [#allocation3], 0
    %11 = vsyncpa [#allocation6], 0
    %12 = vsyncpa [#allocation9], 0
    %13 = vsyncpa [#allocation4], 0
    // Predicated region
    $region2: #{tpu_custom_call.1} parent=1 // pred_check
      _
    $region3: #{tpu_custom_call.1} parent=1 // pred_check_branch
      %15 = sbr.rel (0) target = $region5
    $region4: #{tpu_custom_call.1} parent=1 // pred_region
      %s17 = ssub.s32 64, 64
      %18 = vsyncadd [#allocation3], %s17
      %s20 = sshll.u32 [#allocation2], 4
      %s21 = int_to_ptr.vmem [resolvable:$true] %s20
      %23 = dma.hbm_to_vmem [thread:$0]  %s0, 64, %s21, [#allocation3]
    $region5: #{tpu_custom_call.1} parent=1 // pred_fallthru
      _
    // Predicated region
    $region6: #{tpu_custom_call.1} parent=1 // pred_check
      _
    $region7: #{tpu_custom_call.1} parent=1 // pred_check_branch
      %25 = sbr.rel (0) target = $region9
    $region8: #{tpu_custom_call.1} parent=1 // pred_region
      %s27 = ssub.s32 512, 512
      %28 = vsyncadd [#allocation6], %s27
      %s29 = sshll.u32 [#allocation5], 4
      %s30 = int_to_ptr.vmem [resolvable:$true] %s29
      %35 = dma.hbm_to_vmem [thread:$0]  %s1, 512, %s30, [#allocation6], 128, 128, 8
    $region9: #{tpu_custom_call.1} parent=1 // pred_fallthru
      _
    // Predicated region
    $region10: #{tpu_custom_call.1} parent=1 // pred_check
      _
    $region11: #{tpu_custom_call.1} parent=1 // pred_check_branch
      %37 = sbr.rel (0) target = $region13
    $region12: #{tpu_custom_call.1} parent=1 // pred_region
      %s39 = ssub.s32 32, 32
      %40 = vsyncadd [#allocation6], %s39
      %s42 = sshll.u32 [#allocation7], 4
      %s43 = int_to_ptr.vmem [resolvable:$true] %s42
      %45 = dma.hbm_to_vmem [thread:$0]  %s2, 32, %s43, [#allocation6]
    $region13: #{tpu_custom_call.1} parent=1 // pred_fallthru
      _
    // Predicated region
    $region14: #{tpu_custom_call.1} parent=1 // pred_check
      _
    $region15: #{tpu_custom_call.1} parent=1 // pred_check_branch
      %47 = sbr.rel (0) target = $region17
    $region16: #{tpu_custom_call.1} parent=1 // pred_region
      %s49 = ssub.s32 14336, 14336
      %50 = vsyncadd [#allocation9], %s49
      %s51 = sshll.u32 [#allocation8], 4
      %s52 = int_to_ptr.vmem [resolvable:$true] %s51
      %57 = dma.hbm_to_vmem [thread:$0]  %s3, 14336, %s52, [#allocation9], 448, 448, 28
    $region17: #{tpu_custom_call.1} parent=1 // pred_fallthru
      _
    // Predicated region
    $region18: #{tpu_custom_call.1} parent=1 // pred_check
      _
    $region19: #{tpu_custom_call.1} parent=1 // pred_check_branch
      %59 = sbr.rel (0) target = $region21
    $region20: #{tpu_custom_call.1} parent=1 // pred_region
      _
    $region21: #{tpu_custom_call.1} parent=1 // pred_fallthru
      _
    // Predicated region
    $region22: #{tpu_custom_call.1} parent=1 // pred_check
      _
    $region23: #{tpu_custom_call.1} parent=1 // pred_check_branch
      %61 = sbr.rel (0) target = $region25
    $region24: #{tpu_custom_call.1} parent=1 // pred_region
      %62 = dma.done [#allocation3], 64
    $region25: #{tpu_custom_call.1} parent=1 // pred_fallthru
      _
    // Predicated region
    $region26: #{tpu_custom_call.1} parent=1 // pred_check
      _
    $region27: #{tpu_custom_call.1} parent=1 // pred_check_branch
      %64 = sbr.rel (0) target = $region29
    $region28: #{tpu_custom_call.1} parent=1 // pred_region
      %65 = dma.done [#allocation6], 512
    $region29: #{tpu_custom_call.1} parent=1 // pred_fallthru
      _
    // Predicated region
    $region30: #{tpu_custom_call.1} parent=1 // pred_check
      _
    $region31: #{tpu_custom_call.1} parent=1 // pred_check_branch
      %67 = sbr.rel (0) target = $region33
    $region32: #{tpu_custom_call.1} parent=1 // pred_region
      %68 = dma.done [#allocation6], 32
    $region33: #{tpu_custom_call.1} parent=1 // pred_fallthru
      _
    // Predicated region
    $region34: #{tpu_custom_call.1} parent=1 // pred_check
      _
    $region35: #{tpu_custom_call.1} parent=1 // pred_check_branch
      %70 = sbr.rel (0) target = $region37
    $region36: #{tpu_custom_call.1} parent=1 // pred_region
      %71 = dma.done [#allocation9], 14336
    $region37: #{tpu_custom_call.1} parent=1 // pred_fallthru
      _
    %v73 = vld [vmem:[#allocation2] sm:$0xf]
    %v74 = vld [vmem:[#allocation5] sm:$0xff]
    %v75 = vld [vmem:[#allocation5 + $0x8] sm:$0xff]
    %v76 = vld [vmem:[#allocation5 + $0x10] sm:$0xff]
    %v77 = vld [vmem:[#allocation5 + $0x18] sm:$0xff]
    %v78 = vld [vmem:[#allocation7] sm:$0x3]
    %v80 = vlaneseq
    %v81 = vshrl.u32 %v80, 7
    %v82 = vsub.s32 0, %v81
    %v83 = vrot.slane %v78, %v82
    %v84 = vlaneseq
    %v85 = vshrl.u32 %v84, 7
    %v86 = vsub.s32 1, %v85
    %v87 = vrot.slane %v78, %v86
    %v94 = vunpack.c.l.b16 %v74
    %v95 = vunpack.c.h.b16 %v74
    %v96 = vunpack.c.l.b16 %v75
    %v97 = vunpack.c.h.b16 %v75
    %v98 = vunpack.c.l.b16 %v76
    %v99 = vunpack.c.h.b16 %v76
    %v100 = vunpack.c.l.b16 %v77
    %v101 = vunpack.c.h.b16 %v77
    %v102 = vpack.c.b16 %v96, %v94
    %v103 = vpack.c.b16 %v97, %v95
    %v104 = vpack.c.b16 %v100, %v98
    %v105 = vpack.c.b16 %v101, %v99
    %vm110 = vcmask 261120
    %v112 = vsel %vm110, %v73, 0
    %114 = vmatprep.subr.bf16.mxu0 0
    %115 = vmatpush1.bf16.msra.mxu0 0
    %116 = vmatprep.subr.bf16.mxu0 0
    %117 = vmatpush1.bf16.msra.mxu0 0
    %118 = vmatprep.subr.bf16.mxu0 0
    %119 = vmatpush1.bf16.msra.mxu0 0
    %120 = vmatprep.subr.bf16.mxu0 0
    %121 = vmatpush1.bf16.msra.mxu0 0
    %122 = vmatprep.subr.bf16.mxu0 0
    %123 = vmatpush1.bf16.msra.mxu0 0
    %124 = vmatprep.subr.bf16.mxu0 0
    %125 = vmatpush1.bf16.msra.mxu0 0
    %126 = vmatprep.subr.bf16.mxu0 %v105
    %127 = vmatpush1.bf16.msra.mxu0 %v104
    %128 = vmatprep.subr.bf16.mxu0 %v103
    %129 = vmatpush1.bf16.msra.mxu0 %v102
    %130 = vmatprep.subr.bf16.mxu0 0
    %131 = vmatpush2.bf16.msra.mxu0 0
    %132 = vmatprep.subr.bf16.mxu0 0
    %133 = vmatpush2.bf16.msra.mxu0 0
    %134 = vmatprep.subr.bf16.mxu0 0
    %135 = vmatpush2.bf16.msra.mxu0 0
    %136 = vmatprep.subr.bf16.mxu0 0
    %137 = vmatpush2.bf16.msra.mxu0 0
    %138 = vmatprep.subr.bf16.mxu0 0
    %139 = vmatpush2.bf16.msra.mxu0 0
    %140 = vmatprep.subr.bf16.mxu0 0
    %141 = vmatpush2.bf16.msra.mxu0 0
    %142 = vmatprep.subr.bf16.mxu0 0
    %143 = vmatpush2.bf16.msra.mxu0 0
    %144 = vmatprep.subr.bf16.mxu0 0
    %145 = vmatpush2.bf16.msra.mxu0 0
    %146 = vmatprep.mubr.bf16.mxu0 0
    %147 = vmatmul.mubr.bf16.gmra.mxu0 %v112
    %v148 = vpop.f32.mrf.mxu0
    %v149 = vadd.f32 %v83, %v148
    %v150 = vpop.f32.mrf.mxu0
    %v151 = vadd.f32 %v87, %v150
    %v152 = vpop.f32.mrf.mxu0
    %v153 = vpop.f32.mrf.mxu0
    %154 = vdwg.mxu0
    %v155 = vmax.f32 %v149, 0.0
    %v156 = vmax.f32 %v151, 0.0
    %v157 = vpack.c.bf16 %v155, %v155
    %v158 = vpack.c.bf16 %v156, %v156
    %v159 = vld [vmem:[#allocation8] sm:$0xff]
    %v160 = vld [vmem:[#allocation8 + $0x8] sm:$0xff]
    %v161 = vld [vmem:[#allocation8 + $0x10] sm:$0xff]
    %v162 = vld [vmem:[#allocation8 + $0x18] sm:$0xf]
    %v163 = vld [vmem:[#allocation8 + $0x1c] sm:$0xff]
    %v164 = vld [vmem:[#allocation8 + $0x24] sm:$0xff]
    %v165 = vld [vmem:[#allocation8 + $0x2c] sm:$0xff]
    %v166 = vld [vmem:[#allocation8 + $0x34] sm:$0xf]
    %v167 = vld [vmem:[#allocation8 + $0x38] sm:$0xff]
    %v168 = vld [vmem:[#allocation8 + $0x40] sm:$0xff]
    %v169 = vld [vmem:[#allocation8 + $0x48] sm:$0xff]
    %v170 = vld [vmem:[#allocation8 + $0x50] sm:$0xf]
    %v171 = vld [vmem:[#allocation8 + $0x54] sm:$0xff]
    %v172 = vld [vmem:[#allocation8 + $0x5c] sm:$0xff]
    %v173 = vld [vmem:[#allocation8 + $0x64] sm:$0xff]
    %v174 = vld [vmem:[#allocation8 + $0x6c] sm:$0xf]
    %v175 = vld [vmem:[#allocation8 + $0x70] sm:$0xff]
    %v176 = vld [vmem:[#allocation8 + $0x78] sm:$0xff]
    %v177 = vld [vmem:[#allocation8 + $0x80] sm:$0xff]
    %v178 = vld [vmem:[#allocation8 + $0x88] sm:$0xf]
    %v179 = vld [vmem:[#allocation8 + $0x8c] sm:$0xff]
    %v180 = vld [vmem:[#allocation8 + $0x94] sm:$0xff]
    %v181 = vld [vmem:[#allocation8 + $0x9c] sm:$0xff]
    %v182 = vld [vmem:[#allocation8 + $0xa4] sm:$0xf]
    %v183 = vld [vmem:[#allocation8 + $0xa8] sm:$0xff]
    %v184 = vld [vmem:[#allocation8 + $0xb0] sm:$0xff]
    %v185 = vld [vmem:[#allocation8 + $0xb8] sm:$0xff]
    %v186 = vld [vmem:[#allocation8 + $0xc0] sm:$0xf]
    %v187 = vld [vmem:[#allocation8 + $0xc4] sm:$0xff]
    %v188 = vld [vmem:[#allocation8 + $0xcc] sm:$0xff]
    %v189 = vld [vmem:[#allocation8 + $0xd4] sm:$0xff]
    %v190 = vld [vmem:[#allocation8 + $0xdc] sm:$0xf]
    %v191 = vld [vmem:[#allocation8 + $0xe0] sm:$0xff]
    %v192 = vld [vmem:[#allocation8 + $0xe8] sm:$0xff]
    %v193 = vld [vmem:[#allocation8 + $0xf0] sm:$0xff]
    %v194 = vld [vmem:[#allocation8 + $0xf8] sm:$0xf]
    %v195 = vld [vmem:[#allocation8 + $0xfc] sm:$0xff]
    %v196 = vld [vmem:[#allocation8 + $0x104] sm:$0xff]
    %v197 = vld [vmem:[#allocation8 + $0x10c] sm:$0xff]
    %v198 = vld [vmem:[#allocation8 + $0x114] sm:$0xf]
    %v199 = vld [vmem:[#allocation8 + $0x118] sm:$0xff]
    %v200 = vld [vmem:[#allocation8 + $0x120] sm:$0xff]
    %v201 = vld [vmem:[#allocation8 + $0x128] sm:$0xff]
    %v202 = vld [vmem:[#allocation8 + $0x130] sm:$0xf]
    %v203 = vld [vmem:[#allocation8 + $0x134] sm:$0xff]
    %v204 = vld [vmem:[#allocation8 + $0x13c] sm:$0xff]
    %v205 = vld [vmem:[#allocation8 + $0x144] sm:$0xff]
    %v206 = vld [vmem:[#allocation8 + $0x14c] sm:$0xf]
    %v207 = vld [vmem:[#allocation8 + $0x150] sm:$0xff]
    %v208 = vld [vmem:[#allocation8 + $0x158] sm:$0xff]
    %v209 = vld [vmem:[#allocation8 + $0x160] sm:$0xff]
    %v210 = vld [vmem:[#allocation8 + $0x168] sm:$0xf]
    %v211 = vld [vmem:[#allocation8 + $0x16c] sm:$0xff]
    %v212 = vld [vmem:[#allocation8 + $0x174] sm:$0xff]
    %v213 = vld [vmem:[#allocation8 + $0x17c] sm:$0xff]
    %v214 = vld [vmem:[#allocation8 + $0x184] sm:$0xf]
    %v215 = vld [vmem:[#allocation8 + $0x188] sm:$0xff]
    %v216 = vld [vmem:[#allocation8 + $0x190] sm:$0xff]
    %v217 = vld [vmem:[#allocation8 + $0x198] sm:$0xff]
    %v218 = vld [vmem:[#allocation8 + $0x1a0] sm:$0xf]
    %v219 = vld [vmem:[#allocation8 + $0x1a4] sm:$0xff]
    %v220 = vld [vmem:[#allocation8 + $0x1ac] sm:$0xff]
    %v221 = vld [vmem:[#allocation8 + $0x1b4] sm:$0xff]
    %v222 = vld [vmem:[#allocation8 + $0x1bc] sm:$0xf]
    %v223 = vld [vmem:[#allocation8 + $0x1c0] sm:$0xff]
    %v224 = vld [vmem:[#allocation8 + $0x1c8] sm:$0xff]
    %v225 = vld [vmem:[#allocation8 + $0x1d0] sm:$0xff]
    %v226 = vld [vmem:[#allocation8 + $0x1d8] sm:$0xf]
    %v227 = vld [vmem:[#allocation8 + $0x1dc] sm:$0xff]
    %v228 = vld [vmem:[#allocation8 + $0x1e4] sm:$0xff]
    %v229 = vld [vmem:[#allocation8 + $0x1ec] sm:$0xff]
    %v230 = vld [vmem:[#allocation8 + $0x1f4] sm:$0xf]
    %v231 = vld [vmem:[#allocation8 + $0x1f8] sm:$0xff]
    %v232 = vld [vmem:[#allocation8 + $0x200] sm:$0xff]
    %v233 = vld [vmem:[#allocation8 + $0x208] sm:$0xff]
    %v234 = vld [vmem:[#allocation8 + $0x210] sm:$0xf]
    %v235 = vld [vmem:[#allocation8 + $0x214] sm:$0xff]
    %v236 = vld [vmem:[#allocation8 + $0x21c] sm:$0xff]
    %v237 = vld [vmem:[#allocation8 + $0x224] sm:$0xff]
    %v238 = vld [vmem:[#allocation8 + $0x22c] sm:$0xf]
    %v239 = vld [vmem:[#allocation8 + $0x230] sm:$0xff]
    %v240 = vld [vmem:[#allocation8 + $0x238] sm:$0xff]
    %v241 = vld [vmem:[#allocation8 + $0x240] sm:$0xff]
    %v242 = vld [vmem:[#allocation8 + $0x248] sm:$0xf]
    %v243 = vld [vmem:[#allocation8 + $0x24c] sm:$0xff]
    %v244 = vld [vmem:[#allocation8 + $0x254] sm:$0xff]
    %v245 = vld [vmem:[#allocation8 + $0x25c] sm:$0xff]
    %v246 = vld [vmem:[#allocation8 + $0x264] sm:$0xf]
    %v247 = vld [vmem:[#allocation8 + $0x268] sm:$0xff]
    %v248 = vld [vmem:[#allocation8 + $0x270] sm:$0xff]
    %v249 = vld [vmem:[#allocation8 + $0x278] sm:$0xff]
    %v250 = vld [vmem:[#allocation8 + $0x280] sm:$0xf]
    %v251 = vld [vmem:[#allocation8 + $0x284] sm:$0xff]
    %v252 = vld [vmem:[#allocation8 + $0x28c] sm:$0xff]
    %v253 = vld [vmem:[#allocation8 + $0x294] sm:$0xff]
    %v254 = vld [vmem:[#allocation8 + $0x29c] sm:$0xf]
    %v255 = vld [vmem:[#allocation8 + $0x2a0] sm:$0xff]
    %v256 = vld [vmem:[#allocation8 + $0x2a8] sm:$0xff]
    %v257 = vld [vmem:[#allocation8 + $0x2b0] sm:$0xff]
    %v258 = vld [vmem:[#allocation8 + $0x2b8] sm:$0xf]
    %v259 = vld [vmem:[#allocation8 + $0x2bc] sm:$0xff]
    %v260 = vld [vmem:[#allocation8 + $0x2c4] sm:$0xff]
    %v261 = vld [vmem:[#allocation8 + $0x2cc] sm:$0xff]
    %v262 = vld [vmem:[#allocation8 + $0x2d4] sm:$0xf]
    %v263 = vld [vmem:[#allocation8 + $0x2d8] sm:$0xff]
    %v264 = vld [vmem:[#allocation8 + $0x2e0] sm:$0xff]
    %v265 = vld [vmem:[#allocation8 + $0x2e8] sm:$0xff]
    %v266 = vld [vmem:[#allocation8 + $0x2f0] sm:$0xf]
    %v267 = vld [vmem:[#allocation8 + $0x2f4] sm:$0xff]
    %v268 = vld [vmem:[#allocation8 + $0x2fc] sm:$0xff]
    %v269 = vld [vmem:[#allocation8 + $0x304] sm:$0xff]
    %v270 = vld [vmem:[#allocation8 + $0x30c] sm:$0xf]
    %v271 = vld [vmem:[#allocation8 + $0x310] sm:$0xff]
    %v272 = vld [vmem:[#allocation8 + $0x318] sm:$0xff]
    %v273 = vld [vmem:[#allocation8 + $0x320] sm:$0xff]
    %v274 = vld [vmem:[#allocation8 + $0x328] sm:$0xf]
    %v275 = vld [vmem:[#allocation8 + $0x32c] sm:$0xff]
    %v276 = vld [vmem:[#allocation8 + $0x334] sm:$0xff]
    %v277 = vld [vmem:[#allocation8 + $0x33c] sm:$0xff]
    %v278 = vld [vmem:[#allocation8 + $0x344] sm:$0xf]
    %v279 = vld [vmem:[#allocation8 + $0x348] sm:$0xff]
    %v280 = vld [vmem:[#allocation8 + $0x350] sm:$0xff]
    %v281 = vld [vmem:[#allocation8 + $0x358] sm:$0xff]
    %v282 = vld [vmem:[#allocation8 + $0x360] sm:$0xf]
    %v283 = vld [vmem:[#allocation8 + $0x364] sm:$0xff]
    %v284 = vld [vmem:[#allocation8 + $0x36c] sm:$0xff]
    %v285 = vld [vmem:[#allocation8 + $0x374] sm:$0xff]
    %v286 = vld [vmem:[#allocation8 + $0x37c] sm:$0xf]
    %v287 = vld [vmem:[%s4] sm:$0xff]
    %v289 = vlaneseq
    %v290 = vshrl.u32 %v289, 7
    %v291 = vsub.s32 0, %v290
    %v292 = vrot.slane %v287, %v291
    %v293 = vlaneseq
    %v294 = vshrl.u32 %v293, 7
    %v295 = vsub.s32 1, %v294
    %v296 = vrot.slane %v287, %v295
    %v297 = vlaneseq
    %v298 = vshrl.u32 %v297, 7
    %v299 = vsub.s32 2, %v298
    %v300 = vrot.slane %v287, %v299
    %v301 = vlaneseq
    %v302 = vshrl.u32 %v301, 7
    %v303 = vsub.s32 3, %v302
    %v304 = vrot.slane %v287, %v303
    %v305 = vlaneseq
    %v306 = vshrl.u32 %v305, 7
    %v307 = vsub.s32 4, %v306
    %v308 = vrot.slane %v287, %v307
    %v309 = vlaneseq
    %v310 = vshrl.u32 %v309, 7
    %v311 = vsub.s32 5, %v310
    %v312 = vrot.slane %v287, %v311
    %v313 = vlaneseq
    %v314 = vshrl.u32 %v313, 7
    %v315 = vsub.s32 6, %v314
    %v316 = vrot.slane %v287, %v315
    %v452 = vunpack.c.l.b16 %v159
    %v453 = vunpack.c.h.b16 %v159
    %v454 = vunpack.c.l.b16 %v160
    %v455 = vunpack.c.h.b16 %v160
    %v456 = vunpack.c.l.b16 %v161
    %v457 = vunpack.c.h.b16 %v161
    %v458 = vunpack.c.l.b16 %v162
    %v459 = vunpack.c.l.b16 %v163
    %v460 = vunpack.c.h.b16 %v163
    %v461 = vunpack.c.l.b16 %v164
    %v462 = vunpack.c.h.b16 %v164
    %v463 = vunpack.c.l.b16 %v165
    %v464 = vunpack.c.h.b16 %v165
    %v465 = vunpack.c.l.b16 %v166
    %v466 = vunpack.c.l.b16 %v167
    %v467 = vunpack.c.h.b16 %v167
    %v468 = vunpack.c.l.b16 %v168
    %v469 = vunpack.c.h.b16 %v168
    %v470 = vunpack.c.l.b16 %v169
    %v471 = vunpack.c.h.b16 %v169
    %v472 = vunpack.c.l.b16 %v170
    %v473 = vunpack.c.l.b16 %v171
    %v474 = vunpack.c.h.b16 %v171
    %v475 = vunpack.c.l.b16 %v172
    %v476 = vunpack.c.h.b16 %v172
    %v477 = vunpack.c.l.b16 %v173
    %v478 = vunpack.c.h.b16 %v173
    %v479 = vunpack.c.l.b16 %v174
    %v480 = vunpack.c.l.b16 %v175
    %v481 = vunpack.c.h.b16 %v175
    %v482 = vunpack.c.l.b16 %v176
    %v483 = vunpack.c.h.b16 %v176
    %v484 = vunpack.c.l.b16 %v177
    %v485 = vunpack.c.h.b16 %v177
    %v486 = vunpack.c.l.b16 %v178
    %v487 = vunpack.c.l.b16 %v179
    %v488 = vunpack.c.h.b16 %v179
    %v489 = vunpack.c.l.b16 %v180
    %v490 = vunpack.c.h.b16 %v180
    %v491 = vunpack.c.l.b16 %v181
    %v492 = vunpack.c.h.b16 %v181
    %v493 = vunpack.c.l.b16 %v182
    %v494 = vunpack.c.l.b16 %v183
    %v495 = vunpack.c.h.b16 %v183
    %v496 = vunpack.c.l.b16 %v184
    %v497 = vunpack.c.h.b16 %v184
    %v498 = vunpack.c.l.b16 %v185
    %v499 = vunpack.c.h.b16 %v185
    %v500 = vunpack.c.l.b16 %v186
    %v501 = vunpack.c.l.b16 %v187
    %v502 = vunpack.c.h.b16 %v187
    %v503 = vunpack.c.l.b16 %v188
    %v504 = vunpack.c.h.b16 %v188
    %v505 = vunpack.c.l.b16 %v189
    %v506 = vunpack.c.h.b16 %v189
    %v507 = vunpack.c.l.b16 %v190
    %v508 = vunpack.c.l.b16 %v191
    %v509 = vunpack.c.h.b16 %v191
    %v510 = vunpack.c.l.b16 %v192
    %v511 = vunpack.c.h.b16 %v192
    %v512 = vunpack.c.l.b16 %v193
    %v513 = vunpack.c.h.b16 %v193
    %v514 = vunpack.c.l.b16 %v194
    %v515 = vunpack.c.l.b16 %v195
    %v516 = vunpack.c.h.b16 %v195
    %v517 = vunpack.c.l.b16 %v196
    %v518 = vunpack.c.h.b16 %v196
    %v519 = vunpack.c.l.b16 %v197
    %v520 = vunpack.c.h.b16 %v197
    %v521 = vunpack.c.l.b16 %v198
    %v522 = vunpack.c.l.b16 %v199
    %v523 = vunpack.c.h.b16 %v199
    %v524 = vunpack.c.l.b16 %v200
    %v525 = vunpack.c.h.b16 %v200
    %v526 = vunpack.c.l.b16 %v201
    %v527 = vunpack.c.h.b16 %v201
    %v528 = vunpack.c.l.b16 %v202
    %v529 = vunpack.c.l.b16 %v203
    %v530 = vunpack.c.h.b16 %v203
    %v531 = vunpack.c.l.b16 %v204
    %v532 = vunpack.c.h.b16 %v204
    %v533 = vunpack.c.l.b16 %v205
    %v534 = vunpack.c.h.b16 %v205
    %v535 = vunpack.c.l.b16 %v206
    %v536 = vunpack.c.l.b16 %v207
    %v537 = vunpack.c.h.b16 %v207
    %v538 = vunpack.c.l.b16 %v208
    %v539 = vunpack.c.h.b16 %v208
    %v540 = vunpack.c.l.b16 %v209
    %v541 = vunpack.c.h.b16 %v209
    %v542 = vunpack.c.l.b16 %v210
    %v543 = vunpack.c.l.b16 %v211
    %v544 = vunpack.c.h.b16 %v211
    %v545 = vunpack.c.l.b16 %v212
    %v546 = vunpack.c.h.b16 %v212
    %v547 = vunpack.c.l.b16 %v213
    %v548 = vunpack.c.h.b16 %v213
    %v549 = vunpack.c.l.b16 %v214
    %v550 = vunpack.c.l.b16 %v215
    %v551 = vunpack.c.h.b16 %v215
    %v552 = vunpack.c.l.b16 %v216
    %v553 = vunpack.c.h.b16 %v216
    %v554 = vunpack.c.l.b16 %v217
    %v555 = vunpack.c.h.b16 %v217
    %v556 = vunpack.c.l.b16 %v218
    %v557 = vunpack.c.l.b16 %v219
    %v558 = vunpack.c.h.b16 %v219
    %v559 = vunpack.c.l.b16 %v220
    %v560 = vunpack.c.h.b16 %v220
    %v561 = vunpack.c.l.b16 %v221
    %v562 = vunpack.c.h.b16 %v221
    %v563 = vunpack.c.l.b16 %v222
    %v564 = vunpack.c.l.b16 %v223
    %v565 = vunpack.c.h.b16 %v223
    %v566 = vunpack.c.l.b16 %v224
    %v567 = vunpack.c.h.b16 %v224
    %v568 = vunpack.c.l.b16 %v225
    %v569 = vunpack.c.h.b16 %v225
    %v570 = vunpack.c.l.b16 %v226
    %v571 = vunpack.c.l.b16 %v227
    %v572 = vunpack.c.h.b16 %v227
    %v573 = vunpack.c.l.b16 %v228
    %v574 = vunpack.c.h.b16 %v228
    %v575 = vunpack.c.l.b16 %v229
    %v576 = vunpack.c.h.b16 %v229
    %v577 = vunpack.c.l.b16 %v230
    %v578 = vunpack.c.l.b16 %v231
    %v579 = vunpack.c.h.b16 %v231
    %v580 = vunpack.c.l.b16 %v232
    %v581 = vunpack.c.h.b16 %v232
    %v582 = vunpack.c.l.b16 %v233
    %v583 = vunpack.c.h.b16 %v233
    %v584 = vunpack.c.l.b16 %v234
    %v585 = vunpack.c.l.b16 %v235
    %v586 = vunpack.c.h.b16 %v235
    %v587 = vunpack.c.l.b16 %v236
    %v588 = vunpack.c.h.b16 %v236
    %v589 = vunpack.c.l.b16 %v237
    %v590 = vunpack.c.h.b16 %v237
    %v591 = vunpack.c.l.b16 %v238
    %v592 = vunpack.c.l.b16 %v239
    %v593 = vunpack.c.h.b16 %v239
    %v594 = vunpack.c.l.b16 %v240
    %v595 = vunpack.c.h.b16 %v240
    %v596 = vunpack.c.l.b16 %v241
    %v597 = vunpack.c.h.b16 %v241
    %v598 = vunpack.c.l.b16 %v242
    %v599 = vunpack.c.l.b16 %v243
    %v600 = vunpack.c.h.b16 %v243
    %v601 = vunpack.c.l.b16 %v244
    %v602 = vunpack.c.h.b16 %v244
    %v603 = vunpack.c.l.b16 %v245
    %v604 = vunpack.c.h.b16 %v245
    %v605 = vunpack.c.l.b16 %v246
    %v606 = vunpack.c.l.b16 %v247
    %v607 = vunpack.c.h.b16 %v247
    %v608 = vunpack.c.l.b16 %v248
    %v609 = vunpack.c.h.b16 %v248
    %v610 = vunpack.c.l.b16 %v249
    %v611 = vunpack.c.h.b16 %v249
    %v612 = vunpack.c.l.b16 %v250
    %v613 = vunpack.c.l.b16 %v251
    %v614 = vunpack.c.h.b16 %v251
    %v615 = vunpack.c.l.b16 %v252
    %v616 = vunpack.c.h.b16 %v252
    %v617 = vunpack.c.l.b16 %v253
    %v618 = vunpack.c.h.b16 %v253
    %v619 = vunpack.c.l.b16 %v254
    %v620 = vunpack.c.l.b16 %v255
    %v621 = vunpack.c.h.b16 %v255
    %v622 = vunpack.c.l.b16 %v256
    %v623 = vunpack.c.h.b16 %v256
    %v624 = vunpack.c.l.b16 %v257
    %v625 = vunpack.c.h.b16 %v257
    %v626 = vunpack.c.l.b16 %v258
    %v627 = vunpack.c.l.b16 %v259
    %v628 = vunpack.c.h.b16 %v259
    %v629 = vunpack.c.l.b16 %v260
    %v630 = vunpack.c.h.b16 %v260
    %v631 = vunpack.c.l.b16 %v261
    %v632 = vunpack.c.h.b16 %v261
    %v633 = vunpack.c.l.b16 %v262
    %v634 = vunpack.c.l.b16 %v263
    %v635 = vunpack.c.h.b16 %v263
    %v636 = vunpack.c.l.b16 %v264
    %v637 = vunpack.c.h.b16 %v264
    %v638 = vunpack.c.l.b16 %v265
    %v639 = vunpack.c.h.b16 %v265
    %v640 = vunpack.c.l.b16 %v266
    %v641 = vunpack.c.l.b16 %v267
    %v642 = vunpack.c.h.b16 %v267
    %v643 = vunpack.c.l.b16 %v268
    %v644 = vunpack.c.h.b16 %v268
    %v645 = vunpack.c.l.b16 %v269
    %v646 = vunpack.c.h.b16 %v269
    %v647 = vunpack.c.l.b16 %v270
    %v648 = vunpack.c.l.b16 %v271
    %v649 = vunpack.c.h.b16 %v271
    %v650 = vunpack.c.l.b16 %v272
    %v651 = vunpack.c.h.b16 %v272
    %v652 = vunpack.c.l.b16 %v273
    %v653 = vunpack.c.h.b16 %v273
    %v654 = vunpack.c.l.b16 %v274
    %v655 = vunpack.c.l.b16 %v275
    %v656 = vunpack.c.h.b16 %v275
    %v657 = vunpack.c.l.b16 %v276
    %v658 = vunpack.c.h.b16 %v276
    %v659 = vunpack.c.l.b16 %v277
    %v660 = vunpack.c.h.b16 %v277
    %v661 = vunpack.c.l.b16 %v278
    %v662 = vunpack.c.l.b16 %v279
    %v663 = vunpack.c.h.b16 %v279
    %v664 = vunpack.c.l.b16 %v280
    %v665 = vunpack.c.h.b16 %v280
    %v666 = vunpack.c.l.b16 %v281
    %v667 = vunpack.c.h.b16 %v281
    %v668 = vunpack.c.l.b16 %v282
    %v669 = vunpack.c.l.b16 %v283
    %v670 = vunpack.c.h.b16 %v283
    %v671 = vunpack.c.l.b16 %v284
    %v672 = vunpack.c.h.b16 %v284
    %v673 = vunpack.c.l.b16 %v285
    %v674 = vunpack.c.h.b16 %v285
    %v675 = vunpack.c.l.b16 %v286
    %v676 = vpack.c.b16 %v459, %v452
    %v677 = vpack.c.b16 %v460, %v453
    %v678 = vpack.c.b16 %v461, %v454
    %v679 = vpack.c.b16 %v462, %v455
    %v680 = vpack.c.b16 %v463, %v456
    %v681 = vpack.c.b16 %v464, %v457
    %v682 = vpack.c.b16 %v465, %v458
    %v683 = vpack.c.b16 %v473, %v466
    %v684 = vpack.c.b16 %v474, %v467
    %v685 = vpack.c.b16 %v475, %v468
    %v686 = vpack.c.b16 %v476, %v469
    %v687 = vpack.c.b16 %v477, %v470
    %v688 = vpack.c.b16 %v478, %v471
    %v689 = vpack.c.b16 %v479, %v472
    %v690 = vpack.c.b16 %v487, %v480
    %v691 = vpack.c.b16 %v488, %v481
    %v692 = vpack.c.b16 %v489, %v482
    %v693 = vpack.c.b16 %v490, %v483
    %v694 = vpack.c.b16 %v491, %v484
    %v695 = vpack.c.b16 %v492, %v485
    %v696 = vpack.c.b16 %v493, %v486
    %v697 = vpack.c.b16 %v501, %v494
    %v698 = vpack.c.b16 %v502, %v495
    %v699 = vpack.c.b16 %v503, %v496
    %v700 = vpack.c.b16 %v504, %v497
    %v701 = vpack.c.b16 %v505, %v498
    %v702 = vpack.c.b16 %v506, %v499
    %v703 = vpack.c.b16 %v507, %v500
    %v704 = vpack.c.b16 %v515, %v508
    %v705 = vpack.c.b16 %v516, %v509
    %v706 = vpack.c.b16 %v517, %v510
    %v707 = vpack.c.b16 %v518, %v511
    %v708 = vpack.c.b16 %v519, %v512
    %v709 = vpack.c.b16 %v520, %v513
    %v710 = vpack.c.b16 %v521, %v514
    %v711 = vpack.c.b16 %v529, %v522
    %v712 = vpack.c.b16 %v530, %v523
    %v713 = vpack.c.b16 %v531, %v524
    %v714 = vpack.c.b16 %v532, %v525
    %v715 = vpack.c.b16 %v533, %v526
    %v716 = vpack.c.b16 %v534, %v527
    %v717 = vpack.c.b16 %v535, %v528
    %v718 = vpack.c.b16 %v543, %v536
    %v719 = vpack.c.b16 %v544, %v537
    %v720 = vpack.c.b16 %v545, %v538
    %v721 = vpack.c.b16 %v546, %v539
    %v722 = vpack.c.b16 %v547, %v540
    %v723 = vpack.c.b16 %v548, %v541
    %v724 = vpack.c.b16 %v549, %v542
    %v725 = vpack.c.b16 %v557, %v550
    %v726 = vpack.c.b16 %v558, %v551
    %v727 = vpack.c.b16 %v559, %v552
    %v728 = vpack.c.b16 %v560, %v553
    %v729 = vpack.c.b16 %v561, %v554
    %v730 = vpack.c.b16 %v562, %v555
    %v731 = vpack.c.b16 %v563, %v556
    %v732 = vpack.c.b16 %v571, %v564
    %v733 = vpack.c.b16 %v572, %v565
    %v734 = vpack.c.b16 %v573, %v566
    %v735 = vpack.c.b16 %v574, %v567
    %v736 = vpack.c.b16 %v575, %v568
    %v737 = vpack.c.b16 %v576, %v569
    %v738 = vpack.c.b16 %v577, %v570
    %v739 = vpack.c.b16 %v585, %v578
    %v740 = vpack.c.b16 %v586, %v579
    %v741 = vpack.c.b16 %v587, %v580
    %v742 = vpack.c.b16 %v588, %v581
    %v743 = vpack.c.b16 %v589, %v582
    %v744 = vpack.c.b16 %v590, %v583
    %v745 = vpack.c.b16 %v591, %v584
    %v746 = vpack.c.b16 %v599, %v592
    %v747 = vpack.c.b16 %v600, %v593
    %v748 = vpack.c.b16 %v601, %v594
    %v749 = vpack.c.b16 %v602, %v595
    %v750 = vpack.c.b16 %v603, %v596
    %v751 = vpack.c.b16 %v604, %v597
    %v752 = vpack.c.b16 %v605, %v598
    %v753 = vpack.c.b16 %v613, %v606
    %v754 = vpack.c.b16 %v614, %v607
    %v755 = vpack.c.b16 %v615, %v608
    %v756 = vpack.c.b16 %v616, %v609
    %v757 = vpack.c.b16 %v617, %v610
    %v758 = vpack.c.b16 %v618, %v611
    %v759 = vpack.c.b16 %v619, %v612
    %v760 = vpack.c.b16 %v627, %v620
    %v761 = vpack.c.b16 %v628, %v621
    %v762 = vpack.c.b16 %v629, %v622
    %v763 = vpack.c.b16 %v630, %v623
    %v764 = vpack.c.b16 %v631, %v624
    %v765 = vpack.c.b16 %v632, %v625
    %v766 = vpack.c.b16 %v633, %v626
    %v767 = vpack.c.b16 %v641, %v634
    %v768 = vpack.c.b16 %v642, %v635
    %v769 = vpack.c.b16 %v643, %v636
    %v770 = vpack.c.b16 %v644, %v637
    %v771 = vpack.c.b16 %v645, %v638
    %v772 = vpack.c.b16 %v646, %v639
    %v773 = vpack.c.b16 %v647, %v640
    %v774 = vpack.c.b16 %v655, %v648
    %v775 = vpack.c.b16 %v656, %v649
    %v776 = vpack.c.b16 %v657, %v650
    %v777 = vpack.c.b16 %v658, %v651
    %v778 = vpack.c.b16 %v659, %v652
    %v779 = vpack.c.b16 %v660, %v653
    %v780 = vpack.c.b16 %v661, %v654
    %v781 = vpack.c.b16 %v669, %v662
    %v782 = vpack.c.b16 %v670, %v663
    %v783 = vpack.c.b16 %v671, %v664
    %v784 = vpack.c.b16 %v672, %v665
    %v785 = vpack.c.b16 %v673, %v666
    %v786 = vpack.c.b16 %v674, %v667
    %v787 = vpack.c.b16 %v675, %v668
    %900 = vmatprep.subr.bf16.mxu0 %v726
    %901 = vmatpush1.bf16.msra.mxu0 %v725
    %902 = vmatprep.subr.bf16.mxu0 %v719
    %903 = vmatpush1.bf16.msra.mxu0 %v718
    %904 = vmatprep.subr.bf16.mxu0 %v712
    %905 = vmatpush1.bf16.msra.mxu0 %v711
    %906 = vmatprep.subr.bf16.mxu0 %v705
    %907 = vmatpush1.bf16.msra.mxu0 %v704
    %908 = vmatprep.subr.bf16.mxu0 %v698
    %909 = vmatpush1.bf16.msra.mxu0 %v697
    %910 = vmatprep.subr.bf16.mxu0 %v691
    %911 = vmatpush1.bf16.msra.mxu0 %v690
    %912 = vmatprep.subr.bf16.mxu0 %v684
    %913 = vmatpush1.bf16.msra.mxu0 %v683
    %914 = vmatprep.subr.bf16.mxu0 %v677
    %915 = vmatpush1.bf16.msra.mxu0 %v676
    %916 = vmatprep.subr.bf16.mxu0 %v782
    %917 = vmatpush2.bf16.msra.mxu0 %v781
    %918 = vmatprep.subr.bf16.mxu0 %v775
    %919 = vmatpush2.bf16.msra.mxu0 %v774
    %920 = vmatprep.subr.bf16.mxu0 %v768
    %921 = vmatpush2.bf16.msra.mxu0 %v767
    %922 = vmatprep.subr.bf16.mxu0 %v761
    %923 = vmatpush2.bf16.msra.mxu0 %v760
    %924 = vmatprep.subr.bf16.mxu0 %v754
    %925 = vmatpush2.bf16.msra.mxu0 %v753
    %926 = vmatprep.subr.bf16.mxu0 %v747
    %927 = vmatpush2.bf16.msra.mxu0 %v746
    %928 = vmatprep.subr.bf16.mxu0 %v740
    %929 = vmatpush2.bf16.msra.mxu0 %v739
    %930 = vmatprep.subr.bf16.mxu0 %v733
    %931 = vmatpush2.bf16.msra.mxu0 %v732
    %932 = vmatprep.mubr.bf16.mxu0 %v158
    %933 = vmatmul.mubr.bf16.gmra.mxu0 %v157
    %v934 = vpop.f32.mrf.mxu0
    %v935 = vadd.f32 %v292, %v934
    %v936 = vpop.f32.mrf.mxu0
    %v937 = vadd.f32 %v296, %v936
    %v938 = vpop.f32.mrf.mxu0
    %v939 = vpop.f32.mrf.mxu0
    %940 = vdwg.mxu0
    %941 = vmatprep.subr.bf16.mxu0 %v728
    %942 = vmatpush1.bf16.msra.mxu0 %v727
    %943 = vmatprep.subr.bf16.mxu0 %v721
    %944 = vmatpush1.bf16.msra.mxu0 %v720
    %945 = vmatprep.subr.bf16.mxu0 %v714
    %946 = vmatpush1.bf16.msra.mxu0 %v713
    %947 = vmatprep.subr.bf16.mxu0 %v707
    %948 = vmatpush1.bf16.msra.mxu0 %v706
    %949 = vmatprep.subr.bf16.mxu0 %v700
    %950 = vmatpush1.bf16.msra.mxu0 %v699
    %951 = vmatprep.subr.bf16.mxu0 %v693
    %952 = vmatpush1.bf16.msra.mxu0 %v692
    %953 = vmatprep.subr.bf16.mxu0 %v686
    %954 = vmatpush1.bf16.msra.mxu0 %v685
    %955 = vmatprep.subr.bf16.mxu0 %v679
    %956 = vmatpush1.bf16.msra.mxu0 %v678
    %957 = vmatprep.subr.bf16.mxu0 %v784
    %958 = vmatpush2.bf16.msra.mxu0 %v783
    %959 = vmatprep.subr.bf16.mxu0 %v777
    %960 = vmatpush2.bf16.msra.mxu0 %v776
    %961 = vmatprep.subr.bf16.mxu0 %v770
    %962 = vmatpush2.bf16.msra.mxu0 %v769
    %963 = vmatprep.subr.bf16.mxu0 %v763
    %964 = vmatpush2.bf16.msra.mxu0 %v762
    %965 = vmatprep.subr.bf16.mxu0 %v756
    %966 = vmatpush2.bf16.msra.mxu0 %v755
    %967 = vmatprep.subr.bf16.mxu0 %v749
    %968 = vmatpush2.bf16.msra.mxu0 %v748
    %969 = vmatprep.subr.bf16.mxu0 %v742
    %970 = vmatpush2.bf16.msra.mxu0 %v741
    %971 = vmatprep.subr.bf16.mxu0 %v735
    %972 = vmatpush2.bf16.msra.mxu0 %v734
    %973 = vmatprep.mubr.bf16.mxu0 %v158
    %974 = vmatmul.mubr.bf16.gmra.mxu0 %v157
    %v975 = vpop.f32.mrf.mxu0
    %v976 = vadd.f32 %v300, %v975
    %v977 = vpop.f32.mrf.mxu0
    %v978 = vadd.f32 %v304, %v977
    %v979 = vpop.f32.mrf.mxu0
    %v980 = vpop.f32.mrf.mxu0
    %981 = vdwg.mxu0
    %982 = vmatprep.subr.bf16.mxu0 %v730
    %983 = vmatpush1.bf16.msra.mxu0 %v729
    %984 = vmatprep.subr.bf16.mxu0 %v723
    %985 = vmatpush1.bf16.msra.mxu0 %v722
    %986 = vmatprep.subr.bf16.mxu0 %v716
    %987 = vmatpush1.bf16.msra.mxu0 %v715
    %988 = vmatprep.subr.bf16.mxu0 %v709
    %989 = vmatpush1.bf16.msra.mxu0 %v708
    %990 = vmatprep.subr.bf16.mxu0 %v702
    %991 = vmatpush1.bf16.msra.mxu0 %v701
    %992 = vmatprep.subr.bf16.mxu0 %v695
    %993 = vmatpush1.bf16.msra.mxu0 %v694
    %994 = vmatprep.subr.bf16.mxu0 %v688
    %995 = vmatpush1.bf16.msra.mxu0 %v687
    %996 = vmatprep.subr.bf16.mxu0 %v681
    %997 = vmatpush1.bf16.msra.mxu0 %v680
    %998 = vmatprep.subr.bf16.mxu0 %v786
    %999 = vmatpush2.bf16.msra.mxu0 %v785
    %1000 = vmatprep.subr.bf16.mxu0 %v779
    %1001 = vmatpush2.bf16.msra.mxu0 %v778
    %1002 = vmatprep.subr.bf16.mxu0 %v772
    %1003 = vmatpush2.bf16.msra.mxu0 %v771
    %1004 = vmatprep.subr.bf16.mxu0 %v765
    %1005 = vmatpush2.bf16.msra.mxu0 %v764
    %1006 = vmatprep.subr.bf16.mxu0 %v758
    %1007 = vmatpush2.bf16.msra.mxu0 %v757
    %1008 = vmatprep.subr.bf16.mxu0 %v751
    %1009 = vmatpush2.bf16.msra.mxu0 %v750
    %1010 = vmatprep.subr.bf16.mxu0 %v744
    %1011 = vmatpush2.bf16.msra.mxu0 %v743
    %1012 = vmatprep.subr.bf16.mxu0 %v737
    %1013 = vmatpush2.bf16.msra.mxu0 %v736
    %1014 = vmatprep.mubr.bf16.mxu0 %v158
    %1015 = vmatmul.mubr.bf16.gmra.mxu0 %v157
    %v1016 = vpop.f32.mrf.mxu0
    %v1017 = vadd.f32 %v308, %v1016
    %v1018 = vpop.f32.mrf.mxu0
    %v1019 = vadd.f32 %v312, %v1018
    %v1020 = vpop.f32.mrf.mxu0
    %v1021 = vpop.f32.mrf.mxu0
    %1022 = vdwg.mxu0
    %1023 = vmatprep.subr.bf16.mxu0 0
    %1024 = vmatpush1.bf16.msra.mxu0 %v731
    %1025 = vmatprep.subr.bf16.mxu0 0
    %1026 = vmatpush1.bf16.msra.mxu0 %v724
    %1027 = vmatprep.subr.bf16.mxu0 0
    %1028 = vmatpush1.bf16.msra.mxu0 %v717
    %1029 = vmatprep.subr.bf16.mxu0 0
    %1030 = vmatpush1.bf16.msra.mxu0 %v710
    %1031 = vmatprep.subr.bf16.mxu0 0
    %1032 = vmatpush1.bf16.msra.mxu0 %v703
    %1033 = vmatprep.subr.bf16.mxu0 0
    %1034 = vmatpush1.bf16.msra.mxu0 %v696
    %1035 = vmatprep.subr.bf16.mxu0 0
    %1036 = vmatpush1.bf16.msra.mxu0 %v689
    %1037 = vmatprep.subr.bf16.mxu0 0
    %1038 = vmatpush1.bf16.msra.mxu0 %v682
    %1039 = vmatprep.subr.bf16.mxu0 0
    %1040 = vmatpush2.bf16.msra.mxu0 %v787
    %1041 = vmatprep.subr.bf16.mxu0 0
    %1042 = vmatpush2.bf16.msra.mxu0 %v780
    %1043 = vmatprep.subr.bf16.mxu0 0
    %1044 = vmatpush2.bf16.msra.mxu0 %v773
    %1045 = vmatprep.subr.bf16.mxu0 0
    %1046 = vmatpush2.bf16.msra.mxu0 %v766
    %1047 = vmatprep.subr.bf16.mxu0 0
    %1048 = vmatpush2.bf16.msra.mxu0 %v759
    %1049 = vmatprep.subr.bf16.mxu0 0
    %1050 = vmatpush2.bf16.msra.mxu0 %v752
    %1051 = vmatprep.subr.bf16.mxu0 0
    %1052 = vmatpush2.bf16.msra.mxu0 %v745
    %1053 = vmatprep.subr.bf16.mxu0 0
    %1054 = vmatpush2.bf16.msra.mxu0 %v738
    %1055 = vmatprep.mubr.bf16.mxu0 %v158
    %1056 = vmatmul.mubr.bf16.gmra.mxu0 %v157
    %v1057 = vpop.f32.mrf.mxu0
    %v1058 = vadd.f32 %v316, %v1057
    %v1059 = vpop.f32.mrf.mxu0
    %v1060 = vpop.f32.mrf.mxu0
    %v1061 = vpop.f32.mrf.mxu0
    %1062 = vdwg.mxu0
    %v1063 = vpack.c.bf16 %v935, %v935
    %v1064 = vpack.c.bf16 %v937, %v937
    %v1065 = vpack.c.bf16 %v976, %v976
    %v1066 = vpack.c.bf16 %v978, %v978
    %v1067 = vpack.c.bf16 %v1017, %v1017
    %v1068 = vpack.c.bf16 %v1019, %v1019
    %v1069 = vpack.c.bf16 %v1058, %v1058
    %v1077 = vunpack.c.l.b16 %v1063
    %v1078 = vunpack.c.l.b16 %v1064
    %v1079 = vunpack.c.l.b16 %v1065
    %v1080 = vunpack.c.l.b16 %v1066
    %v1081 = vunpack.c.l.b16 %v1067
    %v1082 = vunpack.c.l.b16 %v1068
    %v1083 = vunpack.c.l.b16 %v1069
    %v1084 = vpack.c.b16 %v1078, %v1077
    %v1085 = vpack.c.b16 %v1080, %v1079
    %v1086 = vpack.c.b16 %v1082, %v1081
    %v1087 = vpack.c.b16 %v1083, %v1083
    %1092 = vst [vmem:[#allocation10] sm:$0xff] %v1084
    %1093 = vst [vmem:[#allocation10 + $0x8] sm:$0xff] %v1085
    %1094 = vst [vmem:[#allocation10 + $0x10] sm:$0xff] %v1086
    %vm1095 = vcmask 125952
    %1096 = vst.msk [vmem:[#allocation10 + $0x18] sm:$0xf] %vm1095, %v1087
    // Predicated region
    $region38: #{tpu_custom_call.1} parent=1 // pred_check
      _
    $region39: #{tpu_custom_call.1} parent=1 // pred_check_branch
      %1098 = sbr.rel (0) target = $region41
    $region40: #{tpu_custom_call.1} parent=1 // pred_region
      %s1100 = ssub.s32 448, 448
      %1101 = vsyncadd [#allocation4], %s1100
      %s1103 = sshll.u32 [#allocation10], 4
      %s1104 = int_to_ptr.vmem [resolvable:$true] %s1103
      %1106 = dma.vmem_to_hbm [thread:$0]  %s1104, 448, %s5, [#allocation4]
    $region41: #{tpu_custom_call.1} parent=1 // pred_fallthru
      _
    // Predicated region
    $region42: #{tpu_custom_call.1} parent=1 // pred_check
      _
    $region43: #{tpu_custom_call.1} parent=1 // pred_check_branch
      %1108 = sbr.rel (0) target = $region45
    $region44: #{tpu_custom_call.1} parent=1 // pred_region
      %1109 = dma.done [#allocation4], 448
    $region45: #{tpu_custom_call.1} parent=1 // pred_fallthru
      _
    %1110 = vsyncpa [#allocation3], 1
    %1111 = vsyncpa [#allocation6], 1
    %1112 = vsyncpa [#allocation9], 1
    %1113 = vsyncpa [#allocation4], 1

</llo_original>
